<compile_context>
chip_gen: v7x
topology: tpu7x:2x2x1
jax: 0.10.0
libtpu: 0.0.40
codegen_flags: <defaults>
</compile_context>

<pallas_src>
import functools

import jax
import jax.numpy as jnp
import numpy as np
from jax.experimental import pallas as pl
from jax.experimental.pallas import tpu as pltpu


def _round_up(x, m):
    return (x + m - 1) // m * m


def _decoder_kernel(x_ref, w_ref, b_ref, o_ref):
    # x_ref: (Bp, H) bf16, w_ref: (H, tn) bf16, b_ref: (1, tn) f32,
    # o_ref: (Bp, tn) f32
    z = jnp.dot(x_ref[...], w_ref[...], preferred_element_type=jnp.float32)
    z = z + b_ref[...]                    # f32 bias, broadcast over batch
    o_ref[...] = jax.nn.sigmoid(z).astype(o_ref.dtype)


@functools.partial(jax.jit, static_argnames=("image_shape", "tn"))
def decoder_forward(encoder_output, weight_t, bias, image_shape, tn=512):
    """encoder_output: (B, hidden_dim) f32
       weight_t:       (hidden_dim, prod(image_shape)) f32 (transposed PyTorch weight)
       bias:           (1, prod(image_shape)) f32
       returns:        (B, *image_shape) f32
    """
    B, H = encoder_output.shape
    N = weight_t.shape[1]

    # --- layout plumbing in the wrapper -------------------------------------
    B_pad = _round_up(max(B, 8), 8)                 # dense sublanes / MXU rows
    tn = min(int(tn), _round_up(N, 128))            # lane-dense tile, <= padded N
    tn = _round_up(tn, 128)
    N_pad = _round_up(N, tn)                        # no partial / masked tiles

    x = encoder_output.astype(jnp.bfloat16)
    if B_pad != B:
        x = jnp.pad(x, ((0, B_pad - B), (0, 0)))

    w = weight_t.astype(jnp.bfloat16)
    b = bias.astype(jnp.float32).reshape(1, N)
    if N_pad != N:
        w = jnp.pad(w, ((0, 0), (0, N_pad - N)))
        b = jnp.pad(b, ((0, 0), (0, N_pad - N)))

    grid = (N_pad // tn,)

    cost = pl.CostEstimate(
        flops=2 * B_pad * H * N_pad,
        transcendentals=B_pad * N_pad,
        bytes_accessed=(w.size * 2 + x.size * 2          # bf16 inputs
                        + b.size * 4 + B_pad * N_pad * 4),  # f32 bias + out
    )

    out = pl.pallas_call(
        _decoder_kernel,
        out_shape=jax.ShapeDtypeStruct((B_pad, N_pad), jnp.float32),
        grid_spec=pltpu.PrefetchScalarGridSpec(
            num_scalar_prefetch=0,
            grid=grid,
            in_specs=[
                pl.BlockSpec((B_pad, H), lambda j: (0, 0)),   # x resident
                pl.BlockSpec((H, tn), lambda j: (0, j)),      # weight tile
                pl.BlockSpec((1, tn), lambda j: (0, j)),      # bias tile
            ],
            out_specs=pl.BlockSpec((B_pad, tn), lambda j: (0, j)),
        ),
        compiler_params=pltpu.CompilerParams(
            dimension_semantics=("parallel",),                # shards on v7x 2-TC
        ),
        cost_estimate=cost,
    )(x, w, b)

    out = out[:B, :N]
    return out.reshape((B,) + image_shape)


def init_decoder_params(key, hidden_dim, image_shape):
    """Deterministic init mimicking nn.Linear defaults (uniform +/- 1/sqrt(fan_in))."""
    n_out = int(np.prod(image_shape))
    k_w, k_b = jax.random.split(key)
    bound = 1.0 / np.sqrt(hidden_dim)
    # PyTorch stores weight as (out_features, in_features); keep it transposed
    # as (in_features, out_features) so the kernel matmul is x @ W_t.
    weight_t = jax.random.uniform(
        k_w, (hidden_dim, n_out), minval=-bound, maxval=bound, dtype=jnp.float32
    )
    bias = jax.random.uniform(
        k_b, (1, n_out), minval=-bound, maxval=bound, dtype=jnp.float32
    )
    return weight_t, bias


if __name__ == "__main__":
    hidden_dim = 32
    image_shape = (1, 16, 16)   # (C, H, W) -> output is NCHW
    batch = 2

    key = jax.random.PRNGKey(0)
    k_params, k_x = jax.random.split(key)

    weight_t, bias = init_decoder_params(k_params, hidden_dim, image_shape)
    x = jax.random.normal(k_x, (batch, hidden_dim), dtype=jnp.float32)

    decoded = decoder_forward(x, weight_t, bias, image_shape)
    decoded = jax.block_until_ready(decoded)
    assert decoded.shape == (batch,) + image_shape

    # Reference with matching bf16 matmul precision (tight tolerance).
    z_ref = jnp.dot(x.astype(jnp.bfloat16), weight_t.astype(jnp.bfloat16),
                    preferred_element_type=jnp.float32) + bias
    ref_bf16 = jax.nn.sigmoid(z_ref).reshape((batch,) + image_shape)
    np.testing.assert_allclose(np.asarray(decoded), np.asarray(ref_bf16),
                               atol=1e-5, rtol=1e-5)

    # Sanity check against the full-f32 reference (loose tolerance: bf16 weights).
    ref_f32 = jax.nn.sigmoid(x @ weight_t + bias).reshape((batch,) + image_shape)
    np.testing.assert_allclose(np.asarray(decoded), np.asarray(ref_f32),
                               atol=2e-2, rtol=2e-2)

    print("KERNEL_OK")
</pallas_src>

<mosaic_0001>
module attributes {stable_mosaic.version = 11 : i64} {
  func.func @_decoder_kernel(%arg0: i32, %arg1: memref<8x32xbf16, #tpu.memory_space<vmem>>, %arg2: memref<32x256xbf16, #tpu.memory_space<vmem>>, %arg3: memref<1x256xf32, #tpu.memory_space<vmem>>, %arg4: memref<8x256xf32, #tpu.memory_space<vmem>>) attributes {dimension_semantics = [#tpu.dimension_semantics<parallel>], iteration_bounds = array<i64: 1>, scalar_prefetch = 0 : i64, scratch_operands = 0 : i64, tpu.core_type = #tpu.core_type<tc>, window_params = [{pipeline_mode = #tpu.pipeline_mode<synchronous>, transform_indices = @transform_0, window_bounds = array<i64: 8, 32>}, {transform_indices = @transform_1, window_bounds = array<i64: 32, 256>}, {transform_indices = @transform_2, window_bounds = array<i64: 1, 256>}, {transform_indices = @transform_3, window_bounds = array<i64: 8, 256>}]} {
    %c0 = arith.constant 0 : index
    %c0_0 = arith.constant 0 : index
    %0 = vector.load %arg1[%c0, %c0_0] : memref<8x32xbf16, #tpu.memory_space<vmem>>, vector<8x32xbf16>
    %c0_1 = arith.constant 0 : index
    %c0_2 = arith.constant 0 : index
    %1 = vector.load %arg2[%c0_1, %c0_2] : memref<32x256xbf16, #tpu.memory_space<vmem>>, vector<32x256xbf16>
    %cst = arith.constant dense<0.000000e+00> : vector<8x256xf32>
    %2 = tpu.matmul %0, %1, %cst {dimension_numbers = #tpu.dot_dimension_numbers<[1], [0], [0], [1], [0, 0, 1, 1], [], []>} : vector<8x32xbf16>, vector<32x256xbf16>, vector<8x256xf32> -> vector<8x256xf32>
    %c0_3 = arith.constant 0 : index
    %c0_4 = arith.constant 0 : index
    %3 = vector.load %arg3[%c0_3, %c0_4] : memref<1x256xf32, #tpu.memory_space<vmem>>, vector<1x256xf32>
    %4 = vector.broadcast %3 : vector<1x256xf32> to vector<8x256xf32>
    %5 = arith.addf %2, %4 : vector<8x256xf32>
    %6 = arith.negf %5 : vector<8x256xf32>
    %7 = math.exp %6 : vector<8x256xf32>
    %cst_5 = arith.constant 1.000000e+00 : f32
    %8 = vector.broadcast %cst_5 : f32 to vector<8x256xf32>
    %9 = arith.addf %8, %7 : vector<8x256xf32>
    %10 = arith.divf %8, %9 : vector<8x256xf32>
    %c0_6 = arith.constant 0 : index
    %c0_7 = arith.constant 0 : index
    %11 = vector.load %arg4[%c0_6, %c0_7] : memref<8x256xf32, #tpu.memory_space<vmem>>, vector<8x256xf32>
    tpu.vector_store %arg4[%c0_6, %c0_7], %10 {strides = array<i32>} : memref<8x256xf32, #tpu.memory_space<vmem>>, vector<8x256xf32>,
    return
  }
  func.func @transform_0(%arg0: i32) -> (i32, i32) {
    %c0_i32 = arith.constant 0 : i32
    %c0_i32_0 = arith.constant 0 : i32
    %c0_i32_1 = arith.constant 0 : i32
    return %c0_i32, %c0_i32_0 : i32, i32
  }
  func.func @transform_1(%arg0: i32) -> (i32, i32) {
    %c0_i32 = arith.constant 0 : i32
    %c0_i32_0 = arith.constant 0 : i32
    return %c0_i32, %arg0 : i32, i32
  }
  func.func @transform_2(%arg0: i32) -> (i32, i32) {
    %c0_i32 = arith.constant 0 : i32
    %c0_i32_0 = arith.constant 0 : i32
    return %c0_i32, %arg0 : i32, i32
  }
  func.func @transform_3(%arg0: i32) -> (i32, i32) {
    %c0_i32 = arith.constant 0 : i32
    %c0_i32_0 = arith.constant 0 : i32
    return %c0_i32, %arg0 : i32, i32
  }
}

</mosaic_0001>

<llo_original>
// kernel: decoder_forward.1
$region0: #{decoder_forward.1}
  #allocation0 [shape = 'u32[]', space=smem, size = 0x4, offset = 0x4, fixed_abs, tag = 'smem constant byte address 0x4 - core index']
  #allocation1 [shape = 'u32[144,128]{1,0:T(1,128)}', space=vmem, size = 0x12000, scoped, tag = 'internal scratch']
  %s0 = inlined_call_operand.vmem [shape: bf16[8,32], index: 0, kind: input, shape index: {}]
  %s1 = inlined_call_operand.vmem [shape: bf16[32,256], index: 1, kind: input, shape index: {}]
  %s2 = inlined_call_operand.vmem [shape: f32[1,256], index: 2, kind: input, shape index: {}]
  %s3 = inlined_call_operand.vmem [shape: f32[8,256], index: 3, kind: output, shape index: {}]
  %s4 = sld [smem:[#allocation0]]
  $region22: #{decoder_forward.1} parent=0
    _
  %s6 = ssub.s32 1, %s4
  %s7 = scalar_select 0, %s6, %s4
  // Predicated region
  $region2: #{decoder_forward.1} parent=0 // pred_check
    _
  $region3: #{decoder_forward.1} parent=0 // pred_check_branch
    %9 = sbr.rel (0) target = $region5
  $region4: #{decoder_forward.1} parent=0 // pred_region
    _
  $region5: #{decoder_forward.1} parent=0 // pred_fallthru
    _
  // Predicated region
  $region6: #{decoder_forward.1} parent=0 // pred_check
    _
  $region7: #{decoder_forward.1} parent=0 // pred_check_branch
    %11 = sbr.rel (0) target = $region9
  $region8: #{decoder_forward.1} parent=0 // pred_region
    _
  $region9: #{decoder_forward.1} parent=0 // pred_fallthru
    _
  // Predicated region
  $region10: #{decoder_forward.1} parent=0 // pred_check
    _
  $region11: #{decoder_forward.1} parent=0 // pred_check_branch
    %13 = sbr.rel (0) target = $region13
  $region12: #{decoder_forward.1} parent=0 // pred_region
    _
  $region13: #{decoder_forward.1} parent=0 // pred_fallthru
    _
  %v15 = vld [vmem:[%s0] sm:$0xf]
  %v16 = vld [vmem:[%s1] sm:$0xff]
  %v17 = vld [vmem:[%s1 + $0x8] sm:$0xff]
  %v18 = vld [vmem:[%s1 + $0x10] sm:$0xff]
  %v19 = vld [vmem:[%s1 + $0x18] sm:$0xff]
  %v20 = vld [vmem:[%s2] sm:$0x3]
  %v22 = vlaneseq
  %v23 = vshrl.u32 %v22, 7
  %v24 = vsub.s32 0, %v23
  %v25 = vrot.slane %v20, %v24
  %v26 = vlaneseq
  %v27 = vshrl.u32 %v26, 7
  %v28 = vsub.s32 1, %v27
  %v29 = vrot.slane %v20, %v28
  %v36 = vunpack.c.l.b16 %v16
  %v37 = vunpack.c.h.b16 %v16
  %v38 = vunpack.c.l.b16 %v17
  %v39 = vunpack.c.h.b16 %v17
  %v40 = vunpack.c.l.b16 %v18
  %v41 = vunpack.c.h.b16 %v18
  %v42 = vunpack.c.l.b16 %v19
  %v43 = vunpack.c.h.b16 %v19
  %v44 = vpack.c.b16 %v38, %v36
  %v45 = vpack.c.b16 %v39, %v37
  %v46 = vpack.c.b16 %v42, %v40
  %v47 = vpack.c.b16 %v43, %v41
  %vm52 = vcmask 261120
  %v54 = vsel %vm52, %v15, 0
  %56 = vmatprep.subr.bf16.mxu0 %v45
  %57 = vmatpush1.bf16.msra.mxu0 %v44
  %58 = vmatprep.subr.bf16.mxu0 %v47
  %59 = vmatpush1.bf16.msra.mxu0 %v46
  %60 = vmatprep.subr.bf16.mxu0 0
  %61 = vmatpush1.bf16.msra.mxu0 0
  %62 = vmatprep.subr.bf16.mxu0 0
  %63 = vmatpush1.bf16.msra.mxu0 0
  %64 = vmatprep.subr.bf16.mxu0 0
  %65 = vmatpush1.bf16.msra.mxu0 0
  %66 = vmatprep.subr.bf16.mxu0 0
  %67 = vmatpush1.bf16.msra.mxu0 0
  %68 = vmatprep.subr.bf16.mxu0 0
  %69 = vmatpush1.bf16.msra.mxu0 0
  %70 = vmatprep.subr.bf16.mxu0 0
  %71 = vmatpush1.bf16.msra.mxu0 0
  %72 = vmatprep.subr.bf16.mxu0 0
  %73 = vmatpush1.bf16.msra.mxu0 0
  %74 = vmatprep.subr.bf16.mxu0 0
  %75 = vmatpush1.bf16.msra.mxu0 0
  %76 = vmatprep.subr.bf16.mxu0 0
  %77 = vmatpush1.bf16.msra.mxu0 0
  %78 = vmatprep.subr.bf16.mxu0 0
  %79 = vmatpush1.bf16.msra.mxu0 0
  %80 = vmatprep.subr.bf16.mxu0 0
  %81 = vmatpush1.bf16.msra.mxu0 0
  %82 = vmatprep.subr.bf16.mxu0 0
  %83 = vmatpush1.bf16.msra.mxu0 0
  %84 = vmatprep.subr.bf16.mxu0 0
  %85 = vmatpush1.bf16.msra.mxu0 0
  %86 = vmatprep.subr.bf16.mxu0 0
  %87 = vmatpush1.bf16.msra.mxu0 0
  %88 = vmatprep.mubr.bf16.mxu0 0
  %89 = vmatmul.mubr.bf16.gmra.mrb[0].mxu0 %v54
  %v90 = vpop.f32.mrb[0].mxu0
  %v91 = vadd.f32 %v25, %v90
  %v92 = vpop.f32.mrb[0].mxu0
  %v93 = vadd.f32 %v29, %v92
  %v94 = vpop.f32.mrb[0].mxu0
  %v95 = vpop.f32.mrb[0].mxu0
  %96 = vdwg.mxu0
  %v97 = vxor.u32 %v91, 2147483648
  %v98 = vxor.u32 %v93, 2147483648
  %v99 = vmul.f32 %v97, 1.442695
  %v100 = vpow.pop %v99
  %v101 = vmul.f32 %v98, 1.442695
  %v102 = vpow.pop %v101
  %v103 = vadd.f32 %v100, 1.0
  %v104 = vadd.f32 %v102, 1.0
  %v105 = vrcp.pop %v103
  %v106 = vmul.f32 1.0, %v105
  %v107 = vrcp.pop %v104
  %v108 = vmul.f32 1.0, %v107
  %109 = vst [vmem:[%s3] sm:$0xff] %v106
  %110 = vst [vmem:[%s3 + $0x8] sm:$0xff] %v108
  // Predicated region
  $region14: #{decoder_forward.1} parent=0 // pred_check
    _
  $region15: #{decoder_forward.1} parent=0 // pred_check_branch
    %112 = sbr.rel (0) target = $region17
  $region16: #{decoder_forward.1} parent=0 // pred_region
    _
  $region17: #{decoder_forward.1} parent=0 // pred_fallthru
    _
  // Predicated region
  $region18: #{decoder_forward.1} parent=0 // pred_check
    _
  $region19: #{decoder_forward.1} parent=0 // pred_check_branch
    %114 = sbr.rel (0) target = $region21
  $region20: #{decoder_forward.1} parent=0 // pred_region
    _
  $region21: #{decoder_forward.1} parent=0 // pred_fallthru
    _

</llo_original>
